<compile_context>
chip_gen: v7x
topology: tpu7x:2x2x1
jax: 0.10.0
libtpu: 0.0.40
codegen_flags: <defaults>
</compile_context>

<pallas_src>
import jax
import jax.numpy as jnp
from jax.experimental import pallas as pl
from jax.experimental.pallas import tpu as pltpu

# ---- configs (the PyTorch module reads these from module-level globals) ----
mlp_config = {
    "fc1_dims": 64,
    "fc2_dims": 64,
    "fc3_dims": 32,
    "output_dims": 2,
}
BN_EPS = 1e-5


def _mlp_kernel(x_ref, w1_ref, w2_ref, w3_ref, w4_ref, bn_ref, out_ref):
    """Fused MLP forward: 4x (Linear[no bias] + folded BatchNorm1d), ReLU on first 3,
    2-class softmax (sigmoid form) at the end."""
    x = x_ref[...].astype(jnp.float32)
    B = x.shape[0]
    inv_b = jnp.float32(1.0 / B)
    bn = bn_ref[...]  # (8, Fmax)

    # For small batches the sublane (XLU) reduction is cheap; once the batch spans
    # many sublane vregs, do the batch reduction on the MXU with a ones-row so the
    # 2 XLU ports stop being the saturating slot.
    use_mxu_moments = B > 8
    ones_row = jnp.ones((1, B), jnp.float32) if use_mxu_moments else None

    def moments(y):
        if use_mxu_moments:
            s1 = jnp.dot(ones_row, y, preferred_element_type=jnp.float32)
            s2 = jnp.dot(ones_row, y * y, preferred_element_type=jnp.float32)
        else:
            s1 = jnp.sum(y, axis=0, keepdims=True)
            s2 = jnp.sum(y * y, axis=0, keepdims=True)
        mean = s1 * inv_b
        # One-pass variance; clamp guards the mild E[y^2]-E[y]^2 cancellation risk.
        var = jnp.maximum(s2 * inv_b - mean * mean, 0.0)
        return mean, var

    def layer(h, w_ref, idx, relu):
        f = w_ref.shape[1]
        # Linear WITHOUT bias: BN's batch-mean subtraction cancels it exactly.
        # (For large B on v6e/v7x, casting h / w to bf16 here with f32 accumulation
        #  roughly doubles MXU throughput; kept f32 to stay bit-close to PyTorch f32.)
        y = jnp.dot(h, w_ref[...], preferred_element_type=jnp.float32)
        mean, var = moments(y)
        gamma = bn[2 * idx: 2 * idx + 1, :f]
        beta = bn[2 * idx + 1: 2 * idx + 2, :f]
        # Fold BN into a single scale/shift -> one full-(B,F) elementwise pass.
        scale = gamma * jax.lax.rsqrt(var + BN_EPS)
        shift = beta - mean * scale
        out = y * scale + shift
        return jnp.maximum(out, 0.0) if relu else out

    h = layer(x, w1_ref, 0, True)
    h = layer(h, w2_ref, 1, True)
    h = layer(h, w3_ref, 2, True)
    logits = layer(h, w4_ref, 3, False)

    n_out = out_ref.shape[-1]
    if n_out == 2:
        # 2-class softmax == sigmoid of the logit difference: removes the cross-lane
        # max/sum reductions; exp runs on the EUP; rows sum to 1 by construction.
        d = logits[:, 0:1] - logits[:, 1:2]
        p0 = 1.0 / (1.0 + jnp.exp(-d))
        probs = jnp.concatenate([p0, 1.0 - p0], axis=-1)
    else:
        z = logits - jnp.max(logits, axis=-1, keepdims=True)
        e = jnp.exp(z)
        probs = e * pl.reciprocal(jnp.sum(e, axis=-1, keepdims=True), approx=False)
    out_ref[...] = probs.astype(out_ref.dtype)


def init_params(key, input_dims):
    """Deterministic parameter init (PyTorch-Linear-like uniform; BN gamma=1, beta=0).

    Biases are still created (and used by the PyTorch-faithful reference) to prove
    that dropping them inside the kernel leaves the forward output unchanged.
    """
    dims = [input_dims,
            mlp_config["fc1_dims"],
            mlp_config["fc2_dims"],
            mlp_config["fc3_dims"],
            mlp_config["output_dims"]]
    params = []
    for i in range(4):
        fan_in, fan_out = dims[i], dims[i + 1]
        key, kw, kb = jax.random.split(key, 3)
        bound = 1.0 / jnp.sqrt(jnp.float32(fan_in))
        w = jax.random.uniform(kw, (fan_in, fan_out), jnp.float32, -bound, bound)
        b = jax.random.uniform(kb, (1, fan_out), jnp.float32, -bound, bound)
        gamma = jnp.ones((1, fan_out), jnp.float32)
        beta = jnp.zeros((1, fan_out), jnp.float32)
        params.extend([w, b, gamma, beta])
    return params


def pack_kernel_args(params):
    """Kernel args: 4 weight matrices + one packed (8, Fmax) BN gamma/beta slab.

    Linear biases are intentionally dropped (dead under training-mode BN)."""
    ws = [params[4 * l] for l in range(4)]
    fmax = max(w.shape[1] for w in ws)
    bn = jnp.zeros((2 * len(ws), fmax), jnp.float32)
    for l in range(4):
        g = params[4 * l + 2].reshape(-1)
        be = params[4 * l + 3].reshape(-1)
        f = g.shape[0]
        bn = bn.at[2 * l, :f].set(g)
        bn = bn.at[2 * l + 1, :f].set(be)
    return ws, bn


def binary_classifier_forward(x, params):
    ws, bn = pack_kernel_args(params)
    B = x.shape[0]
    out_dims = mlp_config["output_dims"]
    vmem = pl.BlockSpec(memory_space=pltpu.MemorySpace.VMEM)
    # Whole batch resident in VMEM (fine at these shapes). For large B, add a leading
    # batch grid axis (BN stats then need a two-phase cross-tile reduction) so v7x's
    # two TensorCores and its smaller 64 MiB VMEM are handled explicitly.
    return pl.pallas_call(
        _mlp_kernel,
        out_shape=jax.ShapeDtypeStruct((B, out_dims), jnp.float32),
        in_specs=[vmem] * (1 + len(ws) + 1),
        out_specs=vmem,
        compiler_params=pltpu.CompilerParams(vmem_limit_bytes=16 * 1024 * 1024),
    )(x, *ws, bn)


def _reference_forward(x, params):
    """Pure-JAX reference faithful to the PyTorch module (includes Linear biases)."""
    h = x.astype(jnp.float32)
    for layer in range(4):
        w, b, g, be = params[4 * layer: 4 * layer + 4]
        y = h @ w + b
        mean = jnp.mean(y, axis=0, keepdims=True)
        var = jnp.mean(jnp.square(y - mean), axis=0, keepdims=True)
        y = (y - mean) / jnp.sqrt(var + BN_EPS) * g + be
        h = jnp.maximum(y, 0.0) if layer < 3 else y
    return jax.nn.softmax(h, axis=-1)


if __name__ == "__main__":
    B = 8            # batch
    INPUT_DIMS = 32  # input_dims

    key = jax.random.PRNGKey(0)
    kx, kp = jax.random.split(key)
    x = jax.random.normal(kx, (B, INPUT_DIMS), jnp.float32)
    params = init_params(kp, INPUT_DIMS)

    out = binary_classifier_forward(x, params)
    out = jax.block_until_ready(out)

    ref = _reference_forward(x, params)
    assert out.shape == (B, mlp_config["output_dims"])
    assert jnp.allclose(out, ref, atol=1e-4, rtol=1e-4)
    assert jnp.allclose(jnp.sum(out, axis=-1), 1.0, atol=1e-5)

    print("KERNEL_OK")
</pallas_src>

<mosaic_0001>
module attributes {stable_mosaic.version = 11 : i64} {
  func.func @_mlp_kernel(%arg0: memref<8x32xf32, #tpu.memory_space<vmem>>, %arg1: memref<32x64xf32, #tpu.memory_space<vmem>>, %arg2: memref<64x64xf32, #tpu.memory_space<vmem>>, %arg3: memref<64x32xf32, #tpu.memory_space<vmem>>, %arg4: memref<32x2xf32, #tpu.memory_space<vmem>>, %arg5: memref<8x64xf32, #tpu.memory_space<vmem>>, %arg6: memref<8x2xf32, #tpu.memory_space<vmem>>) attributes {dimension_semantics = [], scalar_prefetch = 0 : i64, scratch_operands = 0 : i64, tpu.core_type = #tpu.core_type<tc>} {
    %c0 = arith.constant 0 : index
    %c0_0 = arith.constant 0 : index
    %0 = vector.load %arg0[%c0, %c0_0] : memref<8x32xf32, #tpu.memory_space<vmem>>, vector<8x32xf32>
    %c0_1 = arith.constant 0 : index
    %c0_2 = arith.constant 0 : index
    %1 = vector.load %arg5[%c0_1, %c0_2] : memref<8x64xf32, #tpu.memory_space<vmem>>, vector<8x64xf32>
    %c0_3 = arith.constant 0 : index
    %c0_4 = arith.constant 0 : index
    %2 = vector.load %arg1[%c0_3, %c0_4] : memref<32x64xf32, #tpu.memory_space<vmem>>, vector<32x64xf32>
    %cst = arith.constant dense<0.000000e+00> : vector<8x64xf32>
    %3 = tpu.matmul %0, %2, %cst {dimension_numbers = #tpu.dot_dimension_numbers<[1], [0], [0], [1], [0, 0, 1, 1], [], []>} : vector<8x32xf32>, vector<32x64xf32>, vector<8x64xf32> -> vector<8x64xf32>
    %cst_5 = arith.constant dense<0.000000e+00> : vector<64xf32>
    %4 = vector.multi_reduction <add>, %3, %cst_5 [0] : vector<8x64xf32> to vector<64xf32>
    %5 = vector.shape_cast %4 : vector<64xf32> to vector<1x64xf32>
    %6 = arith.mulf %3, %3 : vector<8x64xf32>
    %cst_6 = arith.constant dense<0.000000e+00> : vector<64xf32>
    %7 = vector.multi_reduction <add>, %6, %cst_6 [0] : vector<8x64xf32> to vector<64xf32>
    %8 = vector.shape_cast %7 : vector<64xf32> to vector<1x64xf32>
    %cst_7 = arith.constant 1.250000e-01 : f32
    %9 = vector.broadcast %cst_7 : f32 to vector<1x64xf32>
    %10 = arith.mulf %5, %9 : vector<1x64xf32>
    %cst_8 = arith.constant 1.250000e-01 : f32
    %11 = vector.broadcast %cst_8 : f32 to vector<1x64xf32>
    %12 = arith.mulf %8, %11 : vector<1x64xf32>
    %13 = arith.mulf %10, %10 : vector<1x64xf32>
    %14 = arith.subf %12, %13 : vector<1x64xf32>
    %cst_9 = arith.constant 0.000000e+00 : f32
    %15 = vector.broadcast %cst_9 : f32 to vector<1x64xf32>
    %16 = arith.maximumf %14, %15 : vector<1x64xf32>
    %17 = vector.extract_strided_slice %1 {offsets = [0, 0], sizes = [1, 64], strides = [1, 1]} : vector<8x64xf32> to vector<1x64xf32>
    %18 = vector.extract_strided_slice %1 {offsets = [1, 0], sizes = [1, 64], strides = [1, 1]} : vector<8x64xf32> to vector<1x64xf32>
    %cst_10 = arith.constant 9.99999974E-6 : f32
    %19 = vector.broadcast %cst_10 : f32 to vector<1x64xf32>
    %20 = arith.addf %16, %19 : vector<1x64xf32>
    %21 = math.rsqrt %20 : vector<1x64xf32>
    %22 = arith.mulf %17, %21 : vector<1x64xf32>
    %23 = arith.mulf %10, %22 : vector<1x64xf32>
    %24 = arith.subf %18, %23 : vector<1x64xf32>
    %25 = vector.broadcast %22 : vector<1x64xf32> to vector<8x64xf32>
    %26 = arith.mulf %3, %25 : vector<8x64xf32>
    %27 = vector.broadcast %24 : vector<1x64xf32> to vector<8x64xf32>
    %28 = arith.addf %26, %27 : vector<8x64xf32>
    %cst_11 = arith.constant 0.000000e+00 : f32
    %29 = vector.broadcast %cst_11 : f32 to vector<8x64xf32>
    %30 = arith.maximumf %28, %29 : vector<8x64xf32>
    %c0_12 = arith.constant 0 : index
    %c0_13 = arith.constant 0 : index
    %31 = vector.load %arg2[%c0_12, %c0_13] : memref<64x64xf32, #tpu.memory_space<vmem>>, vector<64x64xf32>
    %cst_14 = arith.constant dense<0.000000e+00> : vector<8x64xf32>
    %32 = tpu.matmul %30, %31, %cst_14 {dimension_numbers = #tpu.dot_dimension_numbers<[1], [0], [0], [1], [0, 0, 1, 1], [], []>} : vector<8x64xf32>, vector<64x64xf32>, vector<8x64xf32> -> vector<8x64xf32>
    %cst_15 = arith.constant dense<0.000000e+00> : vector<64xf32>
    %33 = vector.multi_reduction <add>, %32, %cst_15 [0] : vector<8x64xf32> to vector<64xf32>
    %34 = vector.shape_cast %33 : vector<64xf32> to vector<1x64xf32>
    %35 = arith.mulf %32, %32 : vector<8x64xf32>
    %cst_16 = arith.constant dense<0.000000e+00> : vector<64xf32>
    %36 = vector.multi_reduction <add>, %35, %cst_16 [0] : vector<8x64xf32> to vector<64xf32>
    %37 = vector.shape_cast %36 : vector<64xf32> to vector<1x64xf32>
    %cst_17 = arith.constant 1.250000e-01 : f32
    %38 = vector.broadcast %cst_17 : f32 to vector<1x64xf32>
    %39 = arith.mulf %34, %38 : vector<1x64xf32>
    %cst_18 = arith.constant 1.250000e-01 : f32
    %40 = vector.broadcast %cst_18 : f32 to vector<1x64xf32>
    %41 = arith.mulf %37, %40 : vector<1x64xf32>
    %42 = arith.mulf %39, %39 : vector<1x64xf32>
    %43 = arith.subf %41, %42 : vector<1x64xf32>
    %cst_19 = arith.constant 0.000000e+00 : f32
    %44 = vector.broadcast %cst_19 : f32 to vector<1x64xf32>
    %45 = arith.maximumf %43, %44 : vector<1x64xf32>
    %46 = vector.extract_strided_slice %1 {offsets = [2, 0], sizes = [1, 64], strides = [1, 1]} : vector<8x64xf32> to vector<1x64xf32>
    %47 = vector.extract_strided_slice %1 {offsets = [3, 0], sizes = [1, 64], strides = [1, 1]} : vector<8x64xf32> to vector<1x64xf32>
    %cst_20 = arith.constant 9.99999974E-6 : f32
    %48 = vector.broadcast %cst_20 : f32 to vector<1x64xf32>
    %49 = arith.addf %45, %48 : vector<1x64xf32>
    %50 = math.rsqrt %49 : vector<1x64xf32>
    %51 = arith.mulf %46, %50 : vector<1x64xf32>
    %52 = arith.mulf %39, %51 : vector<1x64xf32>
    %53 = arith.subf %47, %52 : vector<1x64xf32>
    %54 = vector.broadcast %51 : vector<1x64xf32> to vector<8x64xf32>
    %55 = arith.mulf %32, %54 : vector<8x64xf32>
    %56 = vector.broadcast %53 : vector<1x64xf32> to vector<8x64xf32>
    %57 = arith.addf %55, %56 : vector<8x64xf32>
    %cst_21 = arith.constant 0.000000e+00 : f32
    %58 = vector.broadcast %cst_21 : f32 to vector<8x64xf32>
    %59 = arith.maximumf %57, %58 : vector<8x64xf32>
    %c0_22 = arith.constant 0 : index
    %c0_23 = arith.constant 0 : index
    %60 = vector.load %arg3[%c0_22, %c0_23] : memref<64x32xf32, #tpu.memory_space<vmem>>, vector<64x32xf32>
    %cst_24 = arith.constant dense<0.000000e+00> : vector<8x32xf32>
    %61 = tpu.matmul %59, %60, %cst_24 {dimension_numbers = #tpu.dot_dimension_numbers<[1], [0], [0], [1], [0, 0, 1, 1], [], []>} : vector<8x64xf32>, vector<64x32xf32>, vector<8x32xf32> -> vector<8x32xf32>
    %cst_25 = arith.constant dense<0.000000e+00> : vector<32xf32>
    %62 = vector.multi_reduction <add>, %61, %cst_25 [0] : vector<8x32xf32> to vector<32xf32>
    %63 = vector.shape_cast %62 : vector<32xf32> to vector<1x32xf32>
    %64 = arith.mulf %61, %61 : vector<8x32xf32>
    %cst_26 = arith.constant dense<0.000000e+00> : vector<32xf32>
    %65 = vector.multi_reduction <add>, %64, %cst_26 [0] : vector<8x32xf32> to vector<32xf32>
    %66 = vector.shape_cast %65 : vector<32xf32> to vector<1x32xf32>
    %cst_27 = arith.constant 1.250000e-01 : f32
    %67 = vector.broadcast %cst_27 : f32 to vector<1x32xf32>
    %68 = arith.mulf %63, %67 : vector<1x32xf32>
    %cst_28 = arith.constant 1.250000e-01 : f32
    %69 = vector.broadcast %cst_28 : f32 to vector<1x32xf32>
    %70 = arith.mulf %66, %69 : vector<1x32xf32>
    %71 = arith.mulf %68, %68 : vector<1x32xf32>
    %72 = arith.subf %70, %71 : vector<1x32xf32>
    %cst_29 = arith.constant 0.000000e+00 : f32
    %73 = vector.broadcast %cst_29 : f32 to vector<1x32xf32>
    %74 = arith.maximumf %72, %73 : vector<1x32xf32>
    %75 = vector.extract_strided_slice %1 {offsets = [4, 0], sizes = [1, 32], strides = [1, 1]} : vector<8x64xf32> to vector<1x32xf32>
    %76 = vector.extract_strided_slice %1 {offsets = [5, 0], sizes = [1, 32], strides = [1, 1]} : vector<8x64xf32> to vector<1x32xf32>
    %cst_30 = arith.constant 9.99999974E-6 : f32
    %77 = vector.broadcast %cst_30 : f32 to vector<1x32xf32>
    %78 = arith.addf %74, %77 : vector<1x32xf32>
    %79 = math.rsqrt %78 : vector<1x32xf32>
    %80 = arith.mulf %75, %79 : vector<1x32xf32>
    %81 = arith.mulf %68, %80 : vector<1x32xf32>
    %82 = arith.subf %76, %81 : vector<1x32xf32>
    %83 = vector.broadcast %80 : vector<1x32xf32> to vector<8x32xf32>
    %84 = arith.mulf %61, %83 : vector<8x32xf32>
    %85 = vector.broadcast %82 : vector<1x32xf32> to vector<8x32xf32>
    %86 = arith.addf %84, %85 : vector<8x32xf32>
    %cst_31 = arith.constant 0.000000e+00 : f32
    %87 = vector.broadcast %cst_31 : f32 to vector<8x32xf32>
    %88 = arith.maximumf %86, %87 : vector<8x32xf32>
    %c0_32 = arith.constant 0 : index
    %c0_33 = arith.constant 0 : index
    %89 = vector.load %arg4[%c0_32, %c0_33] : memref<32x2xf32, #tpu.memory_space<vmem>>, vector<32x2xf32>
    %cst_34 = arith.constant dense<0.000000e+00> : vector<8x2xf32>
    %90 = tpu.matmul %88, %89, %cst_34 {dimension_numbers = #tpu.dot_dimension_numbers<[1], [0], [0], [1], [0, 0, 1, 1], [], []>} : vector<8x32xf32>, vector<32x2xf32>, vector<8x2xf32> -> vector<8x2xf32>
    %cst_35 = arith.constant dense<0.000000e+00> : vector<2xf32>
    %91 = vector.multi_reduction <add>, %90, %cst_35 [0] : vector<8x2xf32> to vector<2xf32>
    %92 = vector.shape_cast %91 : vector<2xf32> to vector<1x2xf32>
    %93 = arith.mulf %90, %90 : vector<8x2xf32>
    %cst_36 = arith.constant dense<0.000000e+00> : vector<2xf32>
    %94 = vector.multi_reduction <add>, %93, %cst_36 [0] : vector<8x2xf32> to vector<2xf32>
    %95 = vector.shape_cast %94 : vector<2xf32> to vector<1x2xf32>
    %cst_37 = arith.constant 1.250000e-01 : f32
    %96 = vector.broadcast %cst_37 : f32 to vector<1x2xf32>
    %97 = arith.mulf %92, %96 : vector<1x2xf32>
    %cst_38 = arith.constant 1.250000e-01 : f32
    %98 = vector.broadcast %cst_38 : f32 to vector<1x2xf32>
    %99 = arith.mulf %95, %98 : vector<1x2xf32>
    %100 = arith.mulf %97, %97 : vector<1x2xf32>
    %101 = arith.subf %99, %100 : vector<1x2xf32>
    %cst_39 = arith.constant 0.000000e+00 : f32
    %102 = vector.broadcast %cst_39 : f32 to vector<1x2xf32>
    %103 = arith.maximumf %101, %102 : vector<1x2xf32>
    %104 = vector.extract_strided_slice %1 {offsets = [6, 0], sizes = [1, 2], strides = [1, 1]} : vector<8x64xf32> to vector<1x2xf32>
    %105 = vector.extract_strided_slice %1 {offsets = [7, 0], sizes = [1, 2], strides = [1, 1]} : vector<8x64xf32> to vector<1x2xf32>
    %cst_40 = arith.constant 9.99999974E-6 : f32
    %106 = vector.broadcast %cst_40 : f32 to vector<1x2xf32>
    %107 = arith.addf %103, %106 : vector<1x2xf32>
    %108 = math.rsqrt %107 : vector<1x2xf32>
    %109 = arith.mulf %104, %108 : vector<1x2xf32>
    %110 = arith.mulf %97, %109 : vector<1x2xf32>
    %111 = arith.subf %105, %110 : vector<1x2xf32>
    %112 = vector.broadcast %109 : vector<1x2xf32> to vector<8x2xf32>
    %113 = arith.mulf %90, %112 : vector<8x2xf32>
    %114 = vector.broadcast %111 : vector<1x2xf32> to vector<8x2xf32>
    %115 = arith.addf %113, %114 : vector<8x2xf32>
    %116 = vector.extract_strided_slice %115 {offsets = [0, 0], sizes = [8, 1], strides = [1, 1]} : vector<8x2xf32> to vector<8x1xf32>
    %117 = vector.extract_strided_slice %115 {offsets = [0, 1], sizes = [8, 1], strides = [1, 1]} : vector<8x2xf32> to vector<8x1xf32>
    %118 = arith.subf %116, %117 : vector<8x1xf32>
    %cst_41 = arith.constant 0.000000e+00 : f32
    %119 = vector.broadcast %cst_41 : f32 to vector<8x1xf32>
    %120 = arith.subf %119, %118 : vector<8x1xf32>
    %121 = math.exp %120 : vector<8x1xf32>
    %cst_42 = arith.constant 1.000000e+00 : f32
    %122 = vector.broadcast %cst_42 : f32 to vector<8x1xf32>
    %123 = arith.addf %122, %121 : vector<8x1xf32>
    %cst_43 = arith.constant 1.000000e+00 : f32
    %124 = vector.broadcast %cst_43 : f32 to vector<8x1xf32>
    %125 = arith.divf %124, %123 : vector<8x1xf32>
    %cst_44 = arith.constant 1.000000e+00 : f32
    %126 = vector.broadcast %cst_44 : f32 to vector<8x1xf32>
    %127 = arith.subf %126, %125 : vector<8x1xf32>
    %128 = tpu.concatenate %125, %127 in 1 : vector<8x1xf32>, vector<8x1xf32> -> vector<8x2xf32>
    %c0_45 = arith.constant 0 : index
    %c0_46 = arith.constant 0 : index
    %129 = vector.load %arg6[%c0_45, %c0_46] : memref<8x2xf32, #tpu.memory_space<vmem>>, vector<8x2xf32>
    tpu.vector_store %arg6[%c0_45, %c0_46], %128 {strides = array<i32>} : memref<8x2xf32, #tpu.memory_space<vmem>>, vector<8x2xf32>,
    return
  }
}

</mosaic_0001>

<llo_original>
// kernel: tpu_custom_call.1
$region0: #{tpu_custom_call.1}
  #allocation0 [shape = 'u32[]', space=smem, size = 0x4, offset = 0x4, fixed_abs, tag = 'smem constant byte address 0x4 - core index']
  #allocation1 [shape = 'u32[144,128]{1,0:T(1,128)}', space=vmem, size = 0x12000, scoped, tag = 'internal scratch']
  %s0 = inlined_call_operand.vmem [shape: f32[8,32], index: 0, kind: input, shape index: {}]
  %s1 = inlined_call_operand.vmem [shape: f32[32,64], index: 1, kind: input, shape index: {}]
  %s2 = inlined_call_operand.vmem [shape: f32[64,64], index: 2, kind: input, shape index: {}]
  %s3 = inlined_call_operand.vmem [shape: f32[64,32], index: 3, kind: input, shape index: {}]
  %s4 = inlined_call_operand.vmem [shape: f32[32,2], index: 4, kind: input, shape index: {}]
  %s5 = inlined_call_operand.vmem [shape: f32[8,64], index: 5, kind: input, shape index: {}]
  %s6 = inlined_call_operand.vmem [shape: f32[8,2], index: 6, kind: output, shape index: {}]
  %s7 = sld [smem:[#allocation0]]
  $region34: #{tpu_custom_call.1} parent=0
    _
  %s9 = ssub.s32 1, %s7
  %s10 = scalar_select 0, %s9, %s7
  // Predicated region
  $region2: #{tpu_custom_call.1} parent=0 // pred_check
    _
  $region3: #{tpu_custom_call.1} parent=0 // pred_check_branch
    %12 = sbr.rel (0) target = $region5
  $region4: #{tpu_custom_call.1} parent=0 // pred_region
    _
  $region5: #{tpu_custom_call.1} parent=0 // pred_fallthru
    _
  // Predicated region
  $region6: #{tpu_custom_call.1} parent=0 // pred_check
    _
  $region7: #{tpu_custom_call.1} parent=0 // pred_check_branch
    %14 = sbr.rel (0) target = $region9
  $region8: #{tpu_custom_call.1} parent=0 // pred_region
    _
  $region9: #{tpu_custom_call.1} parent=0 // pred_fallthru
    _
  // Predicated region
  $region10: #{tpu_custom_call.1} parent=0 // pred_check
    _
  $region11: #{tpu_custom_call.1} parent=0 // pred_check_branch
    %16 = sbr.rel (0) target = $region13
  $region12: #{tpu_custom_call.1} parent=0 // pred_region
    _
  $region13: #{tpu_custom_call.1} parent=0 // pred_fallthru
    _
  // Predicated region
  $region14: #{tpu_custom_call.1} parent=0 // pred_check
    _
  $region15: #{tpu_custom_call.1} parent=0 // pred_check_branch
    %18 = sbr.rel (0) target = $region17
  $region16: #{tpu_custom_call.1} parent=0 // pred_region
    _
  $region17: #{tpu_custom_call.1} parent=0 // pred_fallthru
    _
  // Predicated region
  $region18: #{tpu_custom_call.1} parent=0 // pred_check
    _
  $region19: #{tpu_custom_call.1} parent=0 // pred_check_branch
    %20 = sbr.rel (0) target = $region21
  $region20: #{tpu_custom_call.1} parent=0 // pred_region
    _
  $region21: #{tpu_custom_call.1} parent=0 // pred_fallthru
    _
  // Predicated region
  $region22: #{tpu_custom_call.1} parent=0 // pred_check
    _
  $region23: #{tpu_custom_call.1} parent=0 // pred_check_branch
    %22 = sbr.rel (0) target = $region25
  $region24: #{tpu_custom_call.1} parent=0 // pred_region
    _
  $region25: #{tpu_custom_call.1} parent=0 // pred_fallthru
    _
  %v23 = vld [vmem:[%s0] sm:$0xff]
  %v24 = vld [vmem:[%s5] sm:$0xff]
  %v25 = vld [vmem:[%s1] sm:$0xff]
  %v26 = vld [vmem:[%s1 + $0x8] sm:$0xff]
  %v27 = vld [vmem:[%s1 + $0x10] sm:$0xff]
  %v28 = vld [vmem:[%s1 + $0x18] sm:$0xff]
  %vm29 = vcmask 261120
  %v31 = vsel %vm29, %v23, 0
  %33 = vmatprep.subr.mxu0 0.0
  %34 = vmatpush1.msra.mxu0 %v25
  %35 = vmatprep.subr.mxu0 0.0
  %36 = vmatpush1.msra.mxu0 %v26
  %37 = vmatprep.subr.mxu0 0.0
  %38 = vmatpush1.msra.mxu0 %v27
  %39 = vmatprep.subr.mxu0 0.0
  %40 = vmatpush1.msra.mxu0 %v28
  %41 = vmatprep.subr.mxu0 0.0
  %42 = vmatpush1.msra.mxu0 0.0
  %43 = vmatprep.subr.mxu0 0.0
  %44 = vmatpush1.msra.mxu0 0.0
  %45 = vmatprep.subr.mxu0 0.0
  %46 = vmatpush1.msra.mxu0 0.0
  %47 = vmatprep.subr.mxu0 0.0
  %48 = vmatpush1.msra.mxu0 0.0
  %49 = vmatprep.subr.mxu0 0.0
  %50 = vmatpush1.msra.mxu0 0.0
  %51 = vmatprep.subr.mxu0 0.0
  %52 = vmatpush1.msra.mxu0 0.0
  %53 = vmatprep.subr.mxu0 0.0
  %54 = vmatpush1.msra.mxu0 0.0
  %55 = vmatprep.subr.mxu0 0.0
  %56 = vmatpush1.msra.mxu0 0.0
  %57 = vmatprep.subr.mxu0 0.0
  %58 = vmatpush1.msra.mxu0 0.0
  %59 = vmatprep.subr.mxu0 0.0
  %60 = vmatpush1.msra.mxu0 0.0
  %61 = vmatprep.subr.mxu0 0.0
  %62 = vmatpush1.msra.mxu0 0.0
  %63 = vmatprep.subr.mxu0 0.0
  %64 = vmatpush1.msra.mxu0 0.0
  %65 = vmatprep.subr.mxu0 0.0
  %66 = vmatpush1.msra.mxu0 0.0
  %67 = vmatprep.subr.mxu0 0.0
  %68 = vmatpush1.msra.mxu0 0.0
  %69 = vmatprep.subr.mxu0 0.0
  %70 = vmatpush1.msra.mxu0 0.0
  %71 = vmatprep.subr.mxu0 0.0
  %72 = vmatpush1.msra.mxu0 0.0
  %73 = vmatprep.subr.mxu0 0.0
  %74 = vmatpush1.msra.mxu0 0.0
  %75 = vmatprep.subr.mxu0 0.0
  %76 = vmatpush1.msra.mxu0 0.0
  %77 = vmatprep.subr.mxu0 0.0
  %78 = vmatpush1.msra.mxu0 0.0
  %79 = vmatprep.subr.mxu0 0.0
  %80 = vmatpush1.msra.mxu0 0.0
  %81 = vmatprep.subr.mxu0 0.0
  %82 = vmatpush1.msra.mxu0 0.0
  %83 = vmatprep.subr.mxu0 0.0
  %84 = vmatpush1.msra.mxu0 0.0
  %85 = vmatprep.subr.mxu0 0.0
  %86 = vmatpush1.msra.mxu0 0.0
  %87 = vmatprep.subr.mxu0 0.0
  %88 = vmatpush1.msra.mxu0 0.0
  %89 = vmatprep.subr.mxu0 0.0
  %90 = vmatpush1.msra.mxu0 0.0
  %91 = vmatprep.subr.mxu0 0.0
  %92 = vmatpush1.msra.mxu0 0.0
  %93 = vmatprep.subr.mxu0 0.0
  %94 = vmatpush1.msra.mxu0 0.0
  %95 = vmatprep.subr.mxu0 0.0
  %96 = vmatpush1.msra.mxu0 0.0
  %97 = vmatprep.mubr.f32.mxu0 0.0
  %98 = vmatmul.mubr.f32.gmra.mrb[0].mxu0 %v31
  %v99 = vpop.f32.mrb[0].mxu0
  %v100 = vadd.f32 0.0, %v99
  %v101 = vpop.f32.mrb[0].mxu0
  %102 = vdwg.mxu0
  %vm103 = vcmask 523264
  %v104 = vsel %vm103, %v100, 0.0
  %v105 = vrot.slane %v104, 4
  %v106 = vadd.f32 %v104, %v105
  %v107 = vrot.slane %v106, 2
  %v108 = vadd.f32 %v106, %v107
  %v109 = vrot.slane %v108, 1
  %v110 = vadd.f32 %v108, %v109
  %v111 = vmul.f32 %v100, %v100
  %v112 = vsel %vm103, %v111, 0.0
  %v113 = vrot.slane %v112, 4
  %v114 = vadd.f32 %v112, %v113
  %v115 = vrot.slane %v114, 2
  %v116 = vadd.f32 %v114, %v115
  %v117 = vrot.slane %v116, 1
  %v118 = vadd.f32 %v116, %v117
  %v119 = vmul.f32 %v110, 0.125
  %v120 = vmul.f32 %v118, 0.125
  %v121 = vmul.f32 %v119, %v119
  %v122 = vsub.f32 %v120, %v121
  %v123 = vmax.f32 %v122, 0.0
  %v124 = vadd.f32 %v123, 1e-05
  %v125 = vrsqrt.pop %v124
  %v126 = vmul.f32 %v24, %v125
  %v127 = vmul.f32 %v119, %v126
  %v129 = vrot.slane %v127, 7
  %v131 = vsub.f32 %v24, %v129
  %v132 = vlaneseq
  %v133 = vshrl.u32 %v132, 7
  %v134 = vsub.s32 0, %v133
  %v135 = vrot.slane %v126, %v134
  %v136 = vmul.f32 %v100, %v135
  %v137 = vlaneseq
  %v138 = vshrl.u32 %v137, 7
  %v139 = vsub.s32 1, %v138
  %v140 = vrot.slane %v131, %v139
  %v141 = vadd.f32 %v136, %v140
  %v142 = vmax.f32 %v141, 0.0
  %v143 = vld [vmem:[%s2] sm:$0xff]
  %v144 = vld [vmem:[%s2 + $0x8] sm:$0xff]
  %v145 = vld [vmem:[%s2 + $0x10] sm:$0xff]
  %v146 = vld [vmem:[%s2 + $0x18] sm:$0xff]
  %v147 = vld [vmem:[%s2 + $0x20] sm:$0xff]
  %v148 = vld [vmem:[%s2 + $0x28] sm:$0xff]
  %v149 = vld [vmem:[%s2 + $0x30] sm:$0xff]
  %v150 = vld [vmem:[%s2 + $0x38] sm:$0xff]
  %v152 = vsel %vm103, %v142, 0
  %154 = vmatprep.subr.mxu0 0.0
  %155 = vmatpush1.msra.mxu0 %v143
  %156 = vmatprep.subr.mxu0 0.0
  %157 = vmatpush1.msra.mxu0 %v144
  %158 = vmatprep.subr.mxu0 0.0
  %159 = vmatpush1.msra.mxu0 %v145
  %160 = vmatprep.subr.mxu0 0.0
  %161 = vmatpush1.msra.mxu0 %v146
  %162 = vmatprep.subr.mxu0 0.0
  %163 = vmatpush1.msra.mxu0 %v147
  %164 = vmatprep.subr.mxu0 0.0
  %165 = vmatpush1.msra.mxu0 %v148
  %166 = vmatprep.subr.mxu0 0.0
  %167 = vmatpush1.msra.mxu0 %v149
  %168 = vmatprep.subr.mxu0 0.0
  %169 = vmatpush1.msra.mxu0 %v150
  %170 = vmatprep.subr.mxu0 0.0
  %171 = vmatpush1.msra.mxu0 0.0
  %172 = vmatprep.subr.mxu0 0.0
  %173 = vmatpush1.msra.mxu0 0.0
  %174 = vmatprep.subr.mxu0 0.0
  %175 = vmatpush1.msra.mxu0 0.0
  %176 = vmatprep.subr.mxu0 0.0
  %177 = vmatpush1.msra.mxu0 0.0
  %178 = vmatprep.subr.mxu0 0.0
  %179 = vmatpush1.msra.mxu0 0.0
  %180 = vmatprep.subr.mxu0 0.0
  %181 = vmatpush1.msra.mxu0 0.0
  %182 = vmatprep.subr.mxu0 0.0
  %183 = vmatpush1.msra.mxu0 0.0
  %184 = vmatprep.subr.mxu0 0.0
  %185 = vmatpush1.msra.mxu0 0.0
  %186 = vmatprep.subr.mxu0 0.0
  %187 = vmatpush1.msra.mxu0 0.0
  %188 = vmatprep.subr.mxu0 0.0
  %189 = vmatpush1.msra.mxu0 0.0
  %190 = vmatprep.subr.mxu0 0.0
  %191 = vmatpush1.msra.mxu0 0.0
  %192 = vmatprep.subr.mxu0 0.0
  %193 = vmatpush1.msra.mxu0 0.0
  %194 = vmatprep.subr.mxu0 0.0
  %195 = vmatpush1.msra.mxu0 0.0
  %196 = vmatprep.subr.mxu0 0.0
  %197 = vmatpush1.msra.mxu0 0.0
  %198 = vmatprep.subr.mxu0 0.0
  %199 = vmatpush1.msra.mxu0 0.0
  %200 = vmatprep.subr.mxu0 0.0
  %201 = vmatpush1.msra.mxu0 0.0
  %202 = vmatprep.subr.mxu0 0.0
  %203 = vmatpush1.msra.mxu0 0.0
  %204 = vmatprep.subr.mxu0 0.0
  %205 = vmatpush1.msra.mxu0 0.0
  %206 = vmatprep.subr.mxu0 0.0
  %207 = vmatpush1.msra.mxu0 0.0
  %208 = vmatprep.subr.mxu0 0.0
  %209 = vmatpush1.msra.mxu0 0.0
  %210 = vmatprep.subr.mxu0 0.0
  %211 = vmatpush1.msra.mxu0 0.0
  %212 = vmatprep.subr.mxu0 0.0
  %213 = vmatpush1.msra.mxu0 0.0
  %214 = vmatprep.subr.mxu0 0.0
  %215 = vmatpush1.msra.mxu0 0.0
  %216 = vmatprep.subr.mxu0 0.0
  %217 = vmatpush1.msra.mxu0 0.0
  %218 = vmatprep.mubr.f32.mxu0 0.0
  %219 = vmatmul.mubr.f32.gmra.mrb[0].mxu0 %v152
  %v220 = vpop.f32.mrb[0].mxu0
  %v221 = vadd.f32 0.0, %v220
  %v222 = vpop.f32.mrb[0].mxu0
  %223 = vdwg.mxu0
  %v224 = vsel %vm103, %v221, 0.0
  %v225 = vrot.slane %v224, 4
  %v226 = vadd.f32 %v224, %v225
  %v227 = vrot.slane %v226, 2
  %v228 = vadd.f32 %v226, %v227
  %v229 = vrot.slane %v228, 1
  %v230 = vadd.f32 %v228, %v229
  %v231 = vmul.f32 %v221, %v221
  %v232 = vsel %vm103, %v231, 0.0
  %v233 = vrot.slane %v232, 4
  %v234 = vadd.f32 %v232, %v233
  %v235 = vrot.slane %v234, 2
  %v236 = vadd.f32 %v234, %v235
  %v237 = vrot.slane %v236, 1
  %v238 = vadd.f32 %v236, %v237
  %v239 = vmul.f32 %v230, 0.125
  %v240 = vmul.f32 %v238, 0.125
  %v241 = vmul.f32 %v239, %v239
  %v242 = vsub.f32 %v240, %v241
  %v243 = vmax.f32 %v242, 0.0
  %v244 = vadd.f32 %v243, 1e-05
  %v245 = vrsqrt.pop %v244
  %v246 = vmul.f32 %v24, %v245
  %v247 = vmul.f32 %v239, %v246
  %v249 = vrot.slane %v247, 7
  %v251 = vsub.f32 %v24, %v249
  %v252 = vlaneseq
  %v253 = vshrl.u32 %v252, 7
  %v254 = vsub.s32 2, %v253
  %v255 = vrot.slane %v246, %v254
  %v256 = vmul.f32 %v221, %v255
  %v257 = vlaneseq
  %v258 = vshrl.u32 %v257, 7
  %v259 = vsub.s32 3, %v258
  %v260 = vrot.slane %v251, %v259
  %v261 = vadd.f32 %v256, %v260
  %v262 = vmax.f32 %v261, 0.0
  %v263 = vld [vmem:[%s3] sm:$0xff]
  %v264 = vld [vmem:[%s3 + $0x8] sm:$0xff]
  %v265 = vld [vmem:[%s3 + $0x10] sm:$0xff]
  %v266 = vld [vmem:[%s3 + $0x18] sm:$0xff]
  %v267 = vld [vmem:[%s3 + $0x20] sm:$0xff]
  %v268 = vld [vmem:[%s3 + $0x28] sm:$0xff]
  %v269 = vld [vmem:[%s3 + $0x30] sm:$0xff]
  %v270 = vld [vmem:[%s3 + $0x38] sm:$0xff]
  %v272 = vsel %vm103, %v262, 0
  %274 = vmatprep.subr.mxu0 0.0
  %275 = vmatpush1.msra.mxu0 %v263
  %276 = vmatprep.subr.mxu0 0.0
  %277 = vmatpush1.msra.mxu0 %v264
  %278 = vmatprep.subr.mxu0 0.0
  %279 = vmatpush1.msra.mxu0 %v265
  %280 = vmatprep.subr.mxu0 0.0
  %281 = vmatpush1.msra.mxu0 %v266
  %282 = vmatprep.subr.mxu0 0.0
  %283 = vmatpush1.msra.mxu0 %v267
  %284 = vmatprep.subr.mxu0 0.0
  %285 = vmatpush1.msra.mxu0 %v268
  %286 = vmatprep.subr.mxu0 0.0
  %287 = vmatpush1.msra.mxu0 %v269
  %288 = vmatprep.subr.mxu0 0.0
  %289 = vmatpush1.msra.mxu0 %v270
  %290 = vmatprep.subr.mxu0 0.0
  %291 = vmatpush1.msra.mxu0 0.0
  %292 = vmatprep.subr.mxu0 0.0
  %293 = vmatpush1.msra.mxu0 0.0
  %294 = vmatprep.subr.mxu0 0.0
  %295 = vmatpush1.msra.mxu0 0.0
  %296 = vmatprep.subr.mxu0 0.0
  %297 = vmatpush1.msra.mxu0 0.0
  %298 = vmatprep.subr.mxu0 0.0
  %299 = vmatpush1.msra.mxu0 0.0
  %300 = vmatprep.subr.mxu0 0.0
  %301 = vmatpush1.msra.mxu0 0.0
  %302 = vmatprep.subr.mxu0 0.0
  %303 = vmatpush1.msra.mxu0 0.0
  %304 = vmatprep.subr.mxu0 0.0
  %305 = vmatpush1.msra.mxu0 0.0
  %306 = vmatprep.subr.mxu0 0.0
  %307 = vmatpush1.msra.mxu0 0.0
  %308 = vmatprep.subr.mxu0 0.0
  %309 = vmatpush1.msra.mxu0 0.0
  %310 = vmatprep.subr.mxu0 0.0
  %311 = vmatpush1.msra.mxu0 0.0
  %312 = vmatprep.subr.mxu0 0.0
  %313 = vmatpush1.msra.mxu0 0.0
  %314 = vmatprep.subr.mxu0 0.0
  %315 = vmatpush1.msra.mxu0 0.0
  %316 = vmatprep.subr.mxu0 0.0
  %317 = vmatpush1.msra.mxu0 0.0
  %318 = vmatprep.subr.mxu0 0.0
  %319 = vmatpush1.msra.mxu0 0.0
  %320 = vmatprep.subr.mxu0 0.0
  %321 = vmatpush1.msra.mxu0 0.0
  %322 = vmatprep.subr.mxu0 0.0
  %323 = vmatpush1.msra.mxu0 0.0
  %324 = vmatprep.subr.mxu0 0.0
  %325 = vmatpush1.msra.mxu0 0.0
  %326 = vmatprep.subr.mxu0 0.0
  %327 = vmatpush1.msra.mxu0 0.0
  %328 = vmatprep.subr.mxu0 0.0
  %329 = vmatpush1.msra.mxu0 0.0
  %330 = vmatprep.subr.mxu0 0.0
  %331 = vmatpush1.msra.mxu0 0.0
  %332 = vmatprep.subr.mxu0 0.0
  %333 = vmatpush1.msra.mxu0 0.0
  %334 = vmatprep.subr.mxu0 0.0
  %335 = vmatpush1.msra.mxu0 0.0
  %336 = vmatprep.subr.mxu0 0.0
  %337 = vmatpush1.msra.mxu0 0.0
  %338 = vmatprep.mubr.f32.mxu0 0.0
  %339 = vmatmul.mubr.f32.gmra.mrb[0].mxu0 %v272
  %v340 = vpop.f32.mrb[0].mxu0
  %v341 = vadd.f32 0.0, %v340
  %v342 = vpop.f32.mrb[0].mxu0
  %343 = vdwg.mxu0
  %v344 = vsel %vm29, %v341, 0.0
  %v345 = vrot.slane %v344, 4
  %v346 = vadd.f32 %v344, %v345
  %v347 = vrot.slane %v346, 2
  %v348 = vadd.f32 %v346, %v347
  %v349 = vrot.slane %v348, 1
  %v350 = vadd.f32 %v348, %v349
  %v351 = vmul.f32 %v341, %v341
  %v352 = vsel %vm29, %v351, 0.0
  %v353 = vrot.slane %v352, 4
  %v354 = vadd.f32 %v352, %v353
  %v355 = vrot.slane %v354, 2
  %v356 = vadd.f32 %v354, %v355
  %v357 = vrot.slane %v356, 1
  %v358 = vadd.f32 %v356, %v357
  %v359 = vmul.f32 %v350, 0.125
  %v360 = vmul.f32 %v358, 0.125
  %v361 = vmul.f32 %v359, %v359
  %v362 = vsub.f32 %v360, %v361
  %v363 = vmax.f32 %v362, 0.0
  %v364 = vadd.f32 %v363, 1e-05
  %v365 = vrsqrt.pop %v364
  %v366 = vmul.f32 %v24, %v365
  %v367 = vmul.f32 %v359, %v366
  %v369 = vrot.slane %v367, 7
  %v371 = vsub.f32 %v24, %v369
  %v372 = vlaneseq
  %v373 = vshrl.u32 %v372, 7
  %v374 = vsub.s32 4, %v373
  %v375 = vrot.slane %v366, %v374
  %v376 = vmul.f32 %v341, %v375
  %v377 = vlaneseq
  %v378 = vshrl.u32 %v377, 7
  %v379 = vsub.s32 5, %v378
  %v380 = vrot.slane %v371, %v379
  %v381 = vadd.f32 %v376, %v380
  %v382 = vmax.f32 %v381, 0.0
  %v383 = vld [vmem:[%s4] sm:$0xff]
  %v384 = vld [vmem:[%s4 + $0x8] sm:$0xff]
  %v385 = vld [vmem:[%s4 + $0x10] sm:$0xff]
  %v386 = vld [vmem:[%s4 + $0x18] sm:$0xff]
  %v388 = vsel %vm29, %v382, 0
  %390 = vmatprep.subr.mxu0 0.0
  %391 = vmatpush1.msra.mxu0 %v383
  %392 = vmatprep.subr.mxu0 0.0
  %393 = vmatpush1.msra.mxu0 %v384
  %394 = vmatprep.subr.mxu0 0.0
  %395 = vmatpush1.msra.mxu0 %v385
  %396 = vmatprep.subr.mxu0 0.0
  %397 = vmatpush1.msra.mxu0 %v386
  %398 = vmatprep.subr.mxu0 0.0
  %399 = vmatpush1.msra.mxu0 0.0
  %400 = vmatprep.subr.mxu0 0.0
  %401 = vmatpush1.msra.mxu0 0.0
  %402 = vmatprep.subr.mxu0 0.0
  %403 = vmatpush1.msra.mxu0 0.0
  %404 = vmatprep.subr.mxu0 0.0
  %405 = vmatpush1.msra.mxu0 0.0
  %406 = vmatprep.subr.mxu0 0.0
  %407 = vmatpush1.msra.mxu0 0.0
  %408 = vmatprep.subr.mxu0 0.0
  %409 = vmatpush1.msra.mxu0 0.0
  %410 = vmatprep.subr.mxu0 0.0
  %411 = vmatpush1.msra.mxu0 0.0
  %412 = vmatprep.subr.mxu0 0.0
  %413 = vmatpush1.msra.mxu0 0.0
  %414 = vmatprep.subr.mxu0 0.0
  %415 = vmatpush1.msra.mxu0 0.0
  %416 = vmatprep.subr.mxu0 0.0
  %417 = vmatpush1.msra.mxu0 0.0
  %418 = vmatprep.subr.mxu0 0.0
  %419 = vmatpush1.msra.mxu0 0.0
  %420 = vmatprep.subr.mxu0 0.0
  %421 = vmatpush1.msra.mxu0 0.0
  %422 = vmatprep.subr.mxu0 0.0
  %423 = vmatpush1.msra.mxu0 0.0
  %424 = vmatprep.subr.mxu0 0.0
  %425 = vmatpush1.msra.mxu0 0.0
  %426 = vmatprep.subr.mxu0 0.0
  %427 = vmatpush1.msra.mxu0 0.0
  %428 = vmatprep.subr.mxu0 0.0
  %429 = vmatpush1.msra.mxu0 0.0
  %430 = vmatprep.subr.mxu0 0.0
  %431 = vmatpush1.msra.mxu0 0.0
  %432 = vmatprep.subr.mxu0 0.0
  %433 = vmatpush1.msra.mxu0 0.0
  %434 = vmatprep.subr.mxu0 0.0
  %435 = vmatpush1.msra.mxu0 0.0
  %436 = vmatprep.subr.mxu0 0.0
  %437 = vmatpush1.msra.mxu0 0.0
  %438 = vmatprep.subr.mxu0 0.0
  %439 = vmatpush1.msra.mxu0 0.0
  %440 = vmatprep.subr.mxu0 0.0
  %441 = vmatpush1.msra.mxu0 0.0
  %442 = vmatprep.subr.mxu0 0.0
  %443 = vmatpush1.msra.mxu0 0.0
  %444 = vmatprep.subr.mxu0 0.0
  %445 = vmatpush1.msra.mxu0 0.0
  %446 = vmatprep.subr.mxu0 0.0
  %447 = vmatpush1.msra.mxu0 0.0
  %448 = vmatprep.subr.mxu0 0.0
  %449 = vmatpush1.msra.mxu0 0.0
  %450 = vmatprep.subr.mxu0 0.0
  %451 = vmatpush1.msra.mxu0 0.0
  %452 = vmatprep.subr.mxu0 0.0
  %453 = vmatpush1.msra.mxu0 0.0
  %454 = vmatprep.mubr.f32.mxu0 0.0
  %455 = vmatmul.mubr.f32.gmra.mrb[0].mxu0 %v388
  %v456 = vpop.f32.mrb[0].mxu0
  %v457 = vadd.f32 0.0, %v456
  %v458 = vpop.f32.mrb[0].mxu0
  %459 = vdwg.mxu0
  %vm460 = vcmask 15360
  %v461 = vsel %vm460, %v457, 0.0
  %v462 = vrot.slane %v461, 4
  %v463 = vadd.f32 %v461, %v462
  %v464 = vrot.slane %v463, 2
  %v465 = vadd.f32 %v463, %v464
  %v466 = vrot.slane %v465, 1
  %v467 = vadd.f32 %v465, %v466
  %v468 = vmul.f32 %v457, %v457
  %v469 = vsel %vm460, %v468, 0.0
  %v470 = vrot.slane %v469, 4
  %v471 = vadd.f32 %v469, %v470
  %v472 = vrot.slane %v471, 2
  %v473 = vadd.f32 %v471, %v472
  %v474 = vrot.slane %v473, 1
  %v475 = vadd.f32 %v473, %v474
  %v476 = vmul.f32 %v467, 0.125
  %v477 = vmul.f32 %v475, 0.125
  %v478 = vmul.f32 %v476, %v476
  %v479 = vsub.f32 %v477, %v478
  %v480 = vmax.f32 %v479, 0.0
  %v481 = vadd.f32 %v480, 1e-05
  %v482 = vrsqrt.pop %v481
  %v483 = vmul.f32 %v24, %v482
  %v484 = vmul.f32 %v476, %v483
  %v486 = vrot.slane %v484, 7
  %v488 = vsub.f32 %v24, %v486
  %v489 = vlaneseq
  %v490 = vshrl.u32 %v489, 7
  %v491 = vsub.s32 6, %v490
  %v492 = vrot.slane %v483, %v491
  %v493 = vmul.f32 %v457, %v492
  %v494 = vlaneseq
  %v495 = vshrl.u32 %v494, 7
  %v496 = vsub.s32 7, %v495
  %v497 = vrot.slane %v488, %v496
  %v498 = vadd.f32 %v493, %v497
  %500 = vrot.lane.b32.xlu0 %v498, 127
  %v501 = vpop.permute.xlu0 %500
  %v503 = vsub.f32 %v498, %v501
  %v504 = vsub.f32 0.0, %v503
  %v505 = vmul.f32 %v504, 1.442695
  %v506 = vpow.pop %v505
  %v507 = vadd.f32 %v506, 1.0
  %v508 = vrcp.pop %v507
  %v509 = vmul.f32 1.0, %v508
  %v510 = vsub.f32 1.0, %v509
  %512 = vrot.lane.b32.xlu0 %v510, 1
  %v513 = vpop.permute.xlu0 %512
  %vm515 = vcmask 7168
  %v516 = vsel %vm515, %v509, %v513
  %517 = vst.msk [vmem:[%s6] sm:$0xff] %vm460, %v516
  // Predicated region
  $region26: #{tpu_custom_call.1} parent=0 // pred_check
    _
  $region27: #{tpu_custom_call.1} parent=0 // pred_check_branch
    %519 = sbr.rel (0) target = $region29
  $region28: #{tpu_custom_call.1} parent=0 // pred_region
    _
  $region29: #{tpu_custom_call.1} parent=0 // pred_fallthru
    _
  // Predicated region
  $region30: #{tpu_custom_call.1} parent=0 // pred_check
    _
  $region31: #{tpu_custom_call.1} parent=0 // pred_check_branch
    %521 = sbr.rel (0) target = $region33
  $region32: #{tpu_custom_call.1} parent=0 // pred_region
    _
  $region33: #{tpu_custom_call.1} parent=0 // pred_fallthru
    _

</llo_original>
